<compile_context>
chip_gen: v5e
topology: v5e:2x2
jax: 0.10.0
libtpu: 0.0.40
codegen_flags: <defaults>
</compile_context>

<pallas_src>
import jax
import jax.numpy as jnp
from jax.experimental import pallas as pl
from jax.experimental.pallas import tpu as pltpu


def round_up(x, m):
    return (x + m - 1) // m * m


# ----------------------------------------------------------------------------- kernel
def regression_ae_kernel(x_ref,
                         we1_ref, be1_ref,      # AE encoder layer 1
                         wc_ref, bc_ref,        # encoder layer 2 fused with regression Lin1
                         w2_ref, b2_ref,        # regression Lin2 (BN1 folded in)
                         w3_ref, b3_ref,        # regression Lin3 (BN2 folded in)
                         out_ref):
    f32, bf16 = jnp.float32, jnp.bfloat16
    x = x_ref[...]                                             # (TB, Dp) bf16

    # --- ae_model encoder: flatten -> Linear -> ReLU -> (Linear fused below) -> z_tilde ---
    h = jnp.dot(x, we1_ref[...], preferred_element_type=f32) + be1_ref[...]
    h = jnp.maximum(h, 0.0).astype(bf16)
    # TODO(synk): ae_model's decoder output x_tilde and z_loss are computed by the module's
    # ae_model but never consumed by RegressionAE.forward (returns only p_tilde), so they are
    # not materialized here.

    # --- regression MLP ---
    # encoder Linear-2 and regression Linear-1 are a single fused matmul (exact: no
    # nonlinearity between them); eval-mode BatchNorms are folded into w2/b2 and w3/b3.
    h1 = jnp.maximum(
        jnp.dot(h, wc_ref[...], preferred_element_type=f32) + bc_ref[...], 0.0).astype(bf16)
    h2 = jnp.maximum(
        jnp.dot(h1, w2_ref[...], preferred_element_type=f32) + b2_ref[...], 0.0).astype(bf16)
    p = jnp.dot(h2, w3_ref[...], preferred_element_type=f32) + b3_ref[...]
    # ReLU + Hardtanh(0, 1) == clip(., 0, 1)
    out_ref[...] = jnp.clip(p, 0.0, 1.0)


# ------------------------------------------------------------------- parameter handling
def make_params(key, in_dim, enc_hidden, latent_dims, regression_dims):
    """Deterministic parameter init (uniform fan-in scaling, like torch Linear)."""
    ks = jax.random.split(key, 16)

    def lin(k, fan_in, fan_out):
        bound = 1.0 / jnp.sqrt(fan_in)
        kw, kb = jax.random.split(k)
        w = jax.random.uniform(kw, (fan_in, fan_out), jnp.float32, -bound, bound)
        b = jax.random.uniform(kb, (1, fan_out), jnp.float32, -bound, bound)
        return w, b

    L2 = latent_dims * 2
    we1, be1 = lin(ks[0], in_dim, enc_hidden)
    we2, be2 = lin(ks[1], enc_hidden, latent_dims)
    w1, b1 = lin(ks[2], latent_dims, L2)
    w2, b2 = lin(ks[3], L2, L2)
    w3, b3 = lin(ks[4], L2, regression_dims)

    # BatchNorm1d (eval mode) as per-feature affine y = x*scale + shift
    eps = 1e-5

    def bn_fold(k):
        kg, kb, km, kv = jax.random.split(k, 4)
        gamma = 1.0 + 0.1 * jax.random.normal(kg, (1, L2), jnp.float32)
        beta = 0.1 * jax.random.normal(kb, (1, L2), jnp.float32)
        mean = 0.1 * jax.random.normal(km, (1, L2), jnp.float32)
        var = jnp.abs(1.0 + 0.1 * jax.random.normal(kv, (1, L2), jnp.float32))
        scale = gamma / jnp.sqrt(var + eps)
        shift = beta - mean * scale
        return scale, shift

    s1, t1 = bn_fold(ks[5])
    s2, t2 = bn_fold(ks[6])

    return dict(we1=we1, be1=be1, we2=we2, be2=be2,
                w1=w1, b1=b1, s1=s1, t1=t1,
                w2=w2, b2=b2, s2=s2, t2=t2,
                w3=w3, b3=b3)


def prep_kernel_params(params, latent_dims, regression_dims):
    """Fold BN into following Linears, fuse we2@w1, pad to lane-dense 128s, bf16 weights."""
    we1, be1 = params['we1'], params['be1']
    D, E = we1.shape
    L2 = latent_dims * 2

    # (1) BN folding: (relu_out*s + t) @ W + b == relu_out @ (diag(s) W) + (t @ W + b)
    w2f = params['w2'] * params['s1'].reshape(-1, 1)
    b2f = params['t1'] @ params['w2'] + params['b2']
    w3f = params['w3'] * params['s2'].reshape(-1, 1)
    b3f = params['t2'] @ params['w3'] + params['b3']

    # (2) Encoder Linear-2 / regression Linear-1 fusion (exact, no intervening nonlinearity):
    #     (relu_h @ we2 + be2) @ w1 + b1 == relu_h @ (we2 @ w1) + (be2 @ w1 + b1)
    wc = params['we2'] @ params['w1']
    bc = params['be2'] @ params['w1'] + params['b1']

    # (3) Lane-dense padding (exact: padded rows/cols are zero).
    Dp = round_up(D, 128)
    Ep = round_up(E, 128)
    L2p = round_up(L2, 128)
    Rp = round_up(regression_dims, 128)

    def pad2(a, r, c):
        return jnp.pad(a, ((0, r - a.shape[0]), (0, c - a.shape[1])))

    bf = lambda a: a.astype(jnp.bfloat16)   # (4) bf16 weights -> native MXU path, half the DMA

    return dict(
        we1=bf(pad2(we1, Dp, Ep)),  be1=pad2(be1, 1, Ep),
        wc=bf(pad2(wc, Ep, L2p)),   bc=pad2(bc, 1, L2p),
        w2=bf(pad2(w2f, L2p, L2p)), b2=pad2(b2f, 1, L2p),
        w3=bf(pad2(w3f, L2p, Rp)),  b3=pad2(b3f, 1, Rp),
    )


# ------------------------------------------------------------------------------ wrapper
def regression_ae_forward(x_nchw, kparams, regression_dims):
    # NOTE: for tiny batches (B <~ 64) the whole forward is a single launch-overhead-dominated
    # grid step; a plain-XLA fallback would be reasonable there.  We keep the Pallas path so the
    # kernel is always exercised.
    B = x_nchw.shape[0]
    x2 = x_nchw.reshape(B, -1).astype(jnp.bfloat16)            # bf16 activation stream

    Dp = kparams['we1'].shape[0]
    Rp = kparams['w3'].shape[1]
    if x2.shape[1] != Dp:                                      # pad features lane-dense
        x2 = jnp.pad(x2, ((0, 0), (0, Dp - x2.shape[1])))

    # Batch tiling: bf16 sublane packing needs TB % 16 == 0.  Prefer tiles up to 512 rows,
    # and size TB so the grid has >= 2 steps when the batch allows it (v7x: 2 TensorCores).
    MIN_TB = 16
    Bm = round_up(B, MIN_TB)
    if Bm >= 2 * MIN_TB:
        TB = min(512, round_up(Bm // 2, MIN_TB))
    else:
        TB = Bm
    Bp = round_up(Bm, TB)
    if Bp != B:
        x2 = jnp.pad(x2, ((0, Bp - B), (0, 0)))
    nb = Bp // TB

    weights = (kparams['we1'], kparams['be1'], kparams['wc'], kparams['bc'],
               kparams['w2'], kparams['b2'], kparams['w3'], kparams['b3'])

    def resident_spec(w):
        # Full-array block with constant index_map: DMA'd once, stays VMEM-resident.
        # (pipeline_mode=pl.Buffered(1) would shave the redundant second buffer, ~0.35 MiB;
        # skipped to keep lowering maximally portable.)
        return pl.BlockSpec(w.shape, lambda i: (0, 0))

    # VMEM budget sanity (double-buffered x/out + double-buffered resident weights) — must
    # stay well under the 32 MiB scoped limit (v7x has only 64 MiB physical VMEM).
    vmem_est = (2 * TB * Dp * 2 + 2 * TB * Rp * 4
                + 2 * sum(int(w.size) * w.dtype.itemsize for w in weights))
    assert vmem_est < 32 * 1024 * 1024, vmem_est

    flops = 2 * Bp * sum(int(w.shape[0]) * int(w.shape[1])
                         for w in (kparams['we1'], kparams['wc'],
                                   kparams['w2'], kparams['w3']))
    bytes_accessed = (int(x2.size) * 2 + Bp * Rp * 4
                      + sum(int(w.size) * w.dtype.itemsize for w in weights))

    out = pl.pallas_call(
        regression_ae_kernel,
        out_shape=jax.ShapeDtypeStruct((Bp, Rp), jnp.float32),
        grid_spec=pltpu.PrefetchScalarGridSpec(
            num_scalar_prefetch=0,
            grid=(nb,),
            in_specs=[pl.BlockSpec((TB, Dp), lambda i: (i, 0))]
                     + [resident_spec(w) for w in weights],
            out_specs=pl.BlockSpec((TB, Rp), lambda i: (i, 0)),
        ),
        compiler_params=pltpu.CompilerParams(
            dimension_semantics=("parallel",),
            vmem_limit_bytes=32 * 1024 * 1024),
        cost_estimate=pl.CostEstimate(flops=flops, transcendentals=0,
                                      bytes_accessed=bytes_accessed),
    )(x2, *weights)

    return out[:B, :regression_dims]


# --------------------------------------------------------------------------- references
def reference_forward(x_nchw, params):
    """Plain-JAX f32 reference with the original (unfolded, unfused, unpadded) semantics."""
    B = x_nchw.shape[0]
    x = x_nchw.reshape(B, -1).astype(jnp.float32)
    h = jnp.maximum(x @ params['we1'] + params['be1'], 0.0)
    z = h @ params['we2'] + params['be2']
    a1 = jnp.maximum(z @ params['w1'] + params['b1'], 0.0) * params['s1'] + params['t1']
    a2 = jnp.maximum(a1 @ params['w2'] + params['b2'], 0.0) * params['s2'] + params['t2']
    p = jnp.maximum(a2 @ params['w3'] + params['b3'], 0.0)
    return jnp.clip(p, 0.0, 1.0)


def reference_prepped(x_nchw, kparams, regression_dims):
    """Reference using exactly the folded/fused/padded bf16 operands the kernel sees."""
    B = x_nchw.shape[0]
    x = x_nchw.reshape(B, -1).astype(jnp.bfloat16)
    Dp = kparams['we1'].shape[0]
    x = jnp.pad(x, ((0, 0), (0, Dp - x.shape[1])))
    f32, bf16 = jnp.float32, jnp.bfloat16
    dot = lambda a, b: jnp.dot(a, b, preferred_element_type=f32)
    h = jnp.maximum(dot(x, kparams['we1']) + kparams['be1'], 0.0).astype(bf16)
    h1 = jnp.maximum(dot(h, kparams['wc']) + kparams['bc'], 0.0).astype(bf16)
    h2 = jnp.maximum(dot(h1, kparams['w2']) + kparams['b2'], 0.0).astype(bf16)
    p = dot(h2, kparams['w3']) + kparams['b3']
    return jnp.clip(p, 0.0, 1.0)[:, :regression_dims]


# --------------------------------------------------------------------------------- main
if __name__ == "__main__":
    # Small shapes consistent with the module's forward.
    B, C, H, W = 2, 4, 16, 16
    in_dim = C * H * W            # 1024
    enc_hidden = 128
    latent_dims = 32
    regression_dims = 16

    key = jax.random.PRNGKey(0)
    kx, kp = jax.random.split(key)
    x = jax.random.normal(kx, (B, C, H, W), jnp.float32)

    params = make_params(kp, in_dim, enc_hidden, latent_dims, regression_dims)
    kparams = prep_kernel_params(params, latent_dims, regression_dims)

    p_tilde = regression_ae_forward(x, kparams, regression_dims)
    p_tilde = jax.block_until_ready(p_tilde)
    assert p_tilde.shape == (B, regression_dims)

    # Kernel-implementation check (same bf16 folded/fused/padded math): tight-ish tolerance.
    ref_k = reference_prepped(x, kparams, regression_dims)
    assert jnp.allclose(p_tilde, ref_k, atol=2e-2, rtol=2e-2), \
        float(jnp.max(jnp.abs(p_tilde - ref_k)))

    # Module-semantics check (pure f32, unfolded BN, unfused): loose tolerance for bf16 path.
    ref_m = reference_forward(x, params)
    assert jnp.allclose(p_tilde, ref_m, atol=6e-2, rtol=6e-2), \
        float(jnp.max(jnp.abs(p_tilde - ref_m)))

    print("KERNEL_OK")
</pallas_src>

<mosaic_0001>
module attributes {stable_mosaic.version = 11 : i64} {
  func.func @regression_ae_kernel(%arg0: i32, %arg1: memref<16x1024xbf16, #tpu.memory_space<vmem>>, %arg2: memref<1024x128xbf16, #tpu.memory_space<vmem>>, %arg3: memref<1x128xf32, #tpu.memory_space<vmem>>, %arg4: memref<128x128xbf16, #tpu.memory_space<vmem>>, %arg5: memref<1x128xf32, #tpu.memory_space<vmem>>, %arg6: memref<128x128xbf16, #tpu.memory_space<vmem>>, %arg7: memref<1x128xf32, #tpu.memory_space<vmem>>, %arg8: memref<128x128xbf16, #tpu.memory_space<vmem>>, %arg9: memref<1x128xf32, #tpu.memory_space<vmem>>, %arg10: memref<16x128xf32, #tpu.memory_space<vmem>>) attributes {dimension_semantics = [#tpu.dimension_semantics<parallel>], iteration_bounds = array<i64: 1>, scalar_prefetch = 0 : i64, scratch_operands = 0 : i64, tpu.core_type = #tpu.core_type<tc>, window_params = [{transform_indices = @transform_0, window_bounds = array<i64: 16, 1024>}, {pipeline_mode = #tpu.pipeline_mode<synchronous>, transform_indices = @transform_1, window_bounds = array<i64: 1024, 128>}, {pipeline_mode = #tpu.pipeline_mode<synchronous>, transform_indices = @transform_2, window_bounds = array<i64: 1, 128>}, {pipeline_mode = #tpu.pipeline_mode<synchronous>, transform_indices = @transform_3, window_bounds = array<i64: 128, 128>}, {pipeline_mode = #tpu.pipeline_mode<synchronous>, transform_indices = @transform_4, window_bounds = array<i64: 1, 128>}, {pipeline_mode = #tpu.pipeline_mode<synchronous>, transform_indices = @transform_5, window_bounds = array<i64: 128, 128>}, {pipeline_mode = #tpu.pipeline_mode<synchronous>, transform_indices = @transform_6, window_bounds = array<i64: 1, 128>}, {pipeline_mode = #tpu.pipeline_mode<synchronous>, transform_indices = @transform_7, window_bounds = array<i64: 128, 128>}, {pipeline_mode = #tpu.pipeline_mode<synchronous>, transform_indices = @transform_8, window_bounds = array<i64: 1, 128>}, {transform_indices = @transform_9, window_bounds = array<i64: 16, 128>}]} {
    %c0 = arith.constant 0 : index
    %c0_0 = arith.constant 0 : index
    %0 = vector.load %arg1[%c0, %c0_0] : memref<16x1024xbf16, #tpu.memory_space<vmem>>, vector<16x1024xbf16>
    %c0_1 = arith.constant 0 : index
    %c0_2 = arith.constant 0 : index
    %1 = vector.load %arg2[%c0_1, %c0_2] : memref<1024x128xbf16, #tpu.memory_space<vmem>>, vector<1024x128xbf16>
    %cst = arith.constant dense<0.000000e+00> : vector<16x128xf32>
    %2 = tpu.matmul %0, %1, %cst {dimension_numbers = #tpu.dot_dimension_numbers<[1], [0], [0], [1], [0, 0, 1, 1], [], []>} : vector<16x1024xbf16>, vector<1024x128xbf16>, vector<16x128xf32> -> vector<16x128xf32>
    %c0_3 = arith.constant 0 : index
    %c0_4 = arith.constant 0 : index
    %3 = vector.load %arg3[%c0_3, %c0_4] : memref<1x128xf32, #tpu.memory_space<vmem>>, vector<1x128xf32>
    %4 = vector.broadcast %3 : vector<1x128xf32> to vector<16x128xf32>
    %5 = arith.addf %2, %4 : vector<16x128xf32>
    %cst_5 = arith.constant 0.000000e+00 : f32
    %6 = vector.broadcast %cst_5 : f32 to vector<16x128xf32>
    %7 = arith.maximumf %5, %6 : vector<16x128xf32>
    %8 = arith.truncf %7 : vector<16x128xf32> to vector<16x128xbf16>
    %c0_6 = arith.constant 0 : index
    %c0_7 = arith.constant 0 : index
    %9 = vector.load %arg4[%c0_6, %c0_7] : memref<128x128xbf16, #tpu.memory_space<vmem>>, vector<128x128xbf16>
    %cst_8 = arith.constant dense<0.000000e+00> : vector<16x128xf32>
    %10 = tpu.matmul %8, %9, %cst_8 {dimension_numbers = #tpu.dot_dimension_numbers<[1], [0], [0], [1], [0, 0, 1, 1], [], []>} : vector<16x128xbf16>, vector<128x128xbf16>, vector<16x128xf32> -> vector<16x128xf32>
    %c0_9 = arith.constant 0 : index
    %c0_10 = arith.constant 0 : index
    %11 = vector.load %arg5[%c0_9, %c0_10] : memref<1x128xf32, #tpu.memory_space<vmem>>, vector<1x128xf32>
    %12 = vector.broadcast %11 : vector<1x128xf32> to vector<16x128xf32>
    %13 = arith.addf %10, %12 : vector<16x128xf32>
    %cst_11 = arith.constant 0.000000e+00 : f32
    %14 = vector.broadcast %cst_11 : f32 to vector<16x128xf32>
    %15 = arith.maximumf %13, %14 : vector<16x128xf32>
    %16 = arith.truncf %15 : vector<16x128xf32> to vector<16x128xbf16>
    %c0_12 = arith.constant 0 : index
    %c0_13 = arith.constant 0 : index
    %17 = vector.load %arg6[%c0_12, %c0_13] : memref<128x128xbf16, #tpu.memory_space<vmem>>, vector<128x128xbf16>
    %cst_14 = arith.constant dense<0.000000e+00> : vector<16x128xf32>
    %18 = tpu.matmul %16, %17, %cst_14 {dimension_numbers = #tpu.dot_dimension_numbers<[1], [0], [0], [1], [0, 0, 1, 1], [], []>} : vector<16x128xbf16>, vector<128x128xbf16>, vector<16x128xf32> -> vector<16x128xf32>
    %c0_15 = arith.constant 0 : index
    %c0_16 = arith.constant 0 : index
    %19 = vector.load %arg7[%c0_15, %c0_16] : memref<1x128xf32, #tpu.memory_space<vmem>>, vector<1x128xf32>
    %20 = vector.broadcast %19 : vector<1x128xf32> to vector<16x128xf32>
    %21 = arith.addf %18, %20 : vector<16x128xf32>
    %cst_17 = arith.constant 0.000000e+00 : f32
    %22 = vector.broadcast %cst_17 : f32 to vector<16x128xf32>
    %23 = arith.maximumf %21, %22 : vector<16x128xf32>
    %24 = arith.truncf %23 : vector<16x128xf32> to vector<16x128xbf16>
    %c0_18 = arith.constant 0 : index
    %c0_19 = arith.constant 0 : index
    %25 = vector.load %arg8[%c0_18, %c0_19] : memref<128x128xbf16, #tpu.memory_space<vmem>>, vector<128x128xbf16>
    %cst_20 = arith.constant dense<0.000000e+00> : vector<16x128xf32>
    %26 = tpu.matmul %24, %25, %cst_20 {dimension_numbers = #tpu.dot_dimension_numbers<[1], [0], [0], [1], [0, 0, 1, 1], [], []>} : vector<16x128xbf16>, vector<128x128xbf16>, vector<16x128xf32> -> vector<16x128xf32>
    %c0_21 = arith.constant 0 : index
    %c0_22 = arith.constant 0 : index
    %27 = vector.load %arg9[%c0_21, %c0_22] : memref<1x128xf32, #tpu.memory_space<vmem>>, vector<1x128xf32>
    %28 = vector.broadcast %27 : vector<1x128xf32> to vector<16x128xf32>
    %29 = arith.addf %26, %28 : vector<16x128xf32>
    %cst_23 = arith.constant 0.000000e+00 : f32
    %cst_24 = arith.constant 1.000000e+00 : f32
    %30 = vector.broadcast %cst_23 : f32 to vector<16x128xf32>
    %31 = arith.maximumf %30, %29 : vector<16x128xf32>
    %32 = vector.broadcast %cst_24 : f32 to vector<16x128xf32>
    %33 = arith.minimumf %32, %31 : vector<16x128xf32>
    %c0_25 = arith.constant 0 : index
    %c0_26 = arith.constant 0 : index
    %34 = vector.load %arg10[%c0_25, %c0_26] : memref<16x128xf32, #tpu.memory_space<vmem>>, vector<16x128xf32>
    tpu.vector_store %arg10[%c0_25, %c0_26], %33 {strides = array<i32>} : memref<16x128xf32, #tpu.memory_space<vmem>>, vector<16x128xf32>,
    return
  }
  func.func @transform_0(%arg0: i32) -> (i32, i32) {
    %c0_i32 = arith.constant 0 : i32
    %c0_i32_0 = arith.constant 0 : i32
    return %arg0, %c0_i32 : i32, i32
  }
  func.func @transform_1(%arg0: i32) -> (i32, i32) {
    %c0_i32 = arith.constant 0 : i32
    %c0_i32_0 = arith.constant 0 : i32
    %c0_i32_1 = arith.constant 0 : i32
    return %c0_i32, %c0_i32_0 : i32, i32
  }
  func.func @transform_2(%arg0: i32) -> (i32, i32) {
    %c0_i32 = arith.constant 0 : i32
    %c0_i32_0 = arith.constant 0 : i32
    %c0_i32_1 = arith.constant 0 : i32
    return %c0_i32, %c0_i32_0 : i32, i32
  }
  func.func @transform_3(%arg0: i32) -> (i32, i32) {
    %c0_i32 = arith.constant 0 : i32
    %c0_i32_0 = arith.constant 0 : i32
    %c0_i32_1 = arith.constant 0 : i32
    return %c0_i32, %c0_i32_0 : i32, i32
  }
  func.func @transform_4(%arg0: i32) -> (i32, i32) {
    %c0_i32 = arith.constant 0 : i32
    %c0_i32_0 = arith.constant 0 : i32
    %c0_i32_1 = arith.constant 0 : i32
    return %c0_i32, %c0_i32_0 : i32, i32
  }
  func.func @transform_5(%arg0: i32) -> (i32, i32) {
    %c0_i32 = arith.constant 0 : i32
    %c0_i32_0 = arith.constant 0 : i32
    %c0_i32_1 = arith.constant 0 : i32
    return %c0_i32, %c0_i32_0 : i32, i32
  }
  func.func @transform_6(%arg0: i32) -> (i32, i32) {
    %c0_i32 = arith.constant 0 : i32
    %c0_i32_0 = arith.constant 0 : i32
    %c0_i32_1 = arith.constant 0 : i32
    return %c0_i32, %c0_i32_0 : i32, i32
  }
  func.func @transform_7(%arg0: i32) -> (i32, i32) {
    %c0_i32 = arith.constant 0 : i32
    %c0_i32_0 = arith.constant 0 : i32
    %c0_i32_1 = arith.constant 0 : i32
    return %c0_i32, %c0_i32_0 : i32, i32
  }
  func.func @transform_8(%arg0: i32) -> (i32, i32) {
    %c0_i32 = arith.constant 0 : i32
    %c0_i32_0 = arith.constant 0 : i32
    %c0_i32_1 = arith.constant 0 : i32
    return %c0_i32, %c0_i32_0 : i32, i32
  }
  func.func @transform_9(%arg0: i32) -> (i32, i32) {
    %c0_i32 = arith.constant 0 : i32
    %c0_i32_0 = arith.constant 0 : i32
    return %arg0, %c0_i32 : i32, i32
  }
}

</mosaic_0001>

<llo_original>
// kernel: tpu_custom_call.1
$region0: #{tpu_custom_call.1}
  #allocation0 [shape = 'u32[]', space=smem, size = 0x4, offset = 0x4, fixed_abs, tag = 'smem constant byte address 0x4 - core index']
  #allocation1 [shape = 'u32[72,128]{1,0:T(1,128)}', space=vmem, size = 0x9000, scoped, tag = 'internal scratch']
  %s0 = inlined_call_operand.hbm [shape: bf16[16,1024], index: 0, kind: input, shape index: {}]
  %s1 = inlined_call_operand.hbm [shape: bf16[1024,128], index: 1, kind: input, shape index: {}]
  %s2 = inlined_call_operand.vmem [shape: f32[1,128], index: 2, kind: input, shape index: {}]
  %s3 = inlined_call_operand.hbm [shape: bf16[128,128], index: 3, kind: input, shape index: {}]
  %s4 = inlined_call_operand.vmem [shape: f32[1,128], index: 4, kind: input, shape index: {}]
  %s5 = inlined_call_operand.hbm [shape: bf16[128,128], index: 5, kind: input, shape index: {}]
  %s6 = inlined_call_operand.vmem [shape: f32[1,128], index: 6, kind: input, shape index: {}]
  %s7 = inlined_call_operand.hbm [shape: bf16[128,128], index: 7, kind: input, shape index: {}]
  %s8 = inlined_call_operand.vmem [shape: f32[1,128], index: 8, kind: input, shape index: {}]
  %s9 = inlined_call_operand.hbm [shape: f32[16,128], index: 9, kind: output, shape index: {}]
  %s10 = sld [smem:[#allocation0]]
  $region66: #{tpu_custom_call.1} parent=0
    _
  %s12 = ssub.s32 1, %s10
  %s13 = scalar_select 0, %s12, %s10
  $region1: #{tpu_custom_call.1} parent=0
    #allocation2 [shape = 'u8[32768]{0}', space=vmem, size = 0x8000, scoped, tag = 'input window, operand 0, single buffered']
    #allocation3 [shape = 's32[1]{0}', space=sflag, size = 0x4, scoped, tag = 'scoped memory for tpu_custom_call.1']
    #allocation4 [shape = 's32[1]{0}', space=sflag, size = 0x4, scoped, tag = 'scoped memory for tpu_custom_call.1']
    #allocation5 [shape = 'u8[262144]{0}', space=vmem, size = 0x40000, scoped, tag = 'input window, operand 1, single buffered']
    #allocation6 [shape = 's32[1]{0}', space=sflag, size = 0x4, scoped, tag = 'scoped memory for tpu_custom_call.1']
    #allocation7 [shape = 'u8[32768]{0}', space=vmem, size = 0x8000, scoped, tag = 'input window, operand 3, single buffered']
    #allocation8 [shape = 'u8[32768]{0}', space=vmem, size = 0x8000, scoped, tag = 'input window, operand 5, single buffered']
    #allocation9 [shape = 's32[1]{0}', space=sflag, size = 0x4, scoped, tag = 'scoped memory for tpu_custom_call.1']
    #allocation10 [shape = 'u8[32768]{0}', space=vmem, size = 0x8000, scoped, tag = 'input window, operand 7, single buffered']
    #allocation11 [shape = 'u8[8192]{0}', space=vmem, size = 0x2000, scoped, tag = 'output window, operand 0, single buffered']
    %14 = vsyncpa [#allocation3], 0
    %15 = vsyncpa [#allocation6], 0
    %16 = vsyncpa [#allocation9], 0
    %17 = vsyncpa [#allocation4], 0
    // Predicated region
    $region2: #{tpu_custom_call.1} parent=1 // pred_check
      _
    $region3: #{tpu_custom_call.1} parent=1 // pred_check_branch
      %19 = sbr.rel (0) target = $region5
    $region4: #{tpu_custom_call.1} parent=1 // pred_region
      %21 = vsyncadd [#allocation3], 0
      %s22 = sshll.u32 %s0, 4
      %s23 = int_to_ptr.hbm [resolvable:$true] %s22
      %s24 = sshll.u32 [#allocation2], 4
      %s25 = int_to_ptr.vmem [resolvable:$true] %s24
      %30 = dma.hbm_to_vmem [thread:$0]  %s23, 1024, %s25, [#allocation3], 512, 512, 32
    $region5: #{tpu_custom_call.1} parent=1 // pred_fallthru
      _
    // Predicated region
    $region6: #{tpu_custom_call.1} parent=1 // pred_check
      _
    $region7: #{tpu_custom_call.1} parent=1 // pred_check_branch
      %32 = sbr.rel (0) target = $region9
    $region8: #{tpu_custom_call.1} parent=1 // pred_region
      %34 = vsyncadd [#allocation6], 0
      %s35 = sshll.u32 %s1, 4
      %s36 = int_to_ptr.hbm [resolvable:$true] %s35
      %s37 = sshll.u32 [#allocation5], 4
      %s38 = int_to_ptr.vmem [resolvable:$true] %s37
      %43 = dma.hbm_to_vmem [thread:$0]  %s36, 8192, %s38, [#allocation6], 64, 64, 4
    $region9: #{tpu_custom_call.1} parent=1 // pred_fallthru
      _
    // Predicated region
    $region10: #{tpu_custom_call.1} parent=1 // pred_check
      _
    $region11: #{tpu_custom_call.1} parent=1 // pred_check_branch
      %45 = sbr.rel (0) target = $region13
    $region12: #{tpu_custom_call.1} parent=1 // pred_region
      _
    $region13: #{tpu_custom_call.1} parent=1 // pred_fallthru
      _
    // Predicated region
    $region14: #{tpu_custom_call.1} parent=1 // pred_check
      _
    $region15: #{tpu_custom_call.1} parent=1 // pred_check_branch
      %47 = sbr.rel (0) target = $region17
    $region16: #{tpu_custom_call.1} parent=1 // pred_region
      %49 = vsyncadd [#allocation6], 0
      %s50 = sshll.u32 %s3, 4
      %s51 = int_to_ptr.hbm [resolvable:$true] %s50
      %s52 = sshll.u32 [#allocation7], 4
      %s53 = int_to_ptr.vmem [resolvable:$true] %s52
      %58 = dma.hbm_to_vmem [thread:$0]  %s51, 1024, %s53, [#allocation6], 64, 64, 4
    $region17: #{tpu_custom_call.1} parent=1 // pred_fallthru
      _
    // Predicated region
    $region18: #{tpu_custom_call.1} parent=1 // pred_check
      _
    $region19: #{tpu_custom_call.1} parent=1 // pred_check_branch
      %60 = sbr.rel (0) target = $region21
    $region20: #{tpu_custom_call.1} parent=1 // pred_region
      _
    $region21: #{tpu_custom_call.1} parent=1 // pred_fallthru
      _
    // Predicated region
    $region22: #{tpu_custom_call.1} parent=1 // pred_check
      _
    $region23: #{tpu_custom_call.1} parent=1 // pred_check_branch
      %62 = sbr.rel (0) target = $region25
    $region24: #{tpu_custom_call.1} parent=1 // pred_region
      %64 = vsyncadd [#allocation9], 0
      %s65 = sshll.u32 %s5, 4
      %s66 = int_to_ptr.hbm [resolvable:$true] %s65
      %s67 = sshll.u32 [#allocation8], 4
      %s68 = int_to_ptr.vmem [resolvable:$true] %s67
      %73 = dma.hbm_to_vmem [thread:$0]  %s66, 1024, %s68, [#allocation9], 64, 64, 4
    $region25: #{tpu_custom_call.1} parent=1 // pred_fallthru
      _
    // Predicated region
    $region26: #{tpu_custom_call.1} parent=1 // pred_check
      _
    $region27: #{tpu_custom_call.1} parent=1 // pred_check_branch
      %75 = sbr.rel (0) target = $region29
    $region28: #{tpu_custom_call.1} parent=1 // pred_region
      _
    $region29: #{tpu_custom_call.1} parent=1 // pred_fallthru
      _
    // Predicated region
    $region30: #{tpu_custom_call.1} parent=1 // pred_check
      _
    $region31: #{tpu_custom_call.1} parent=1 // pred_check_branch
      %77 = sbr.rel (0) target = $region33
    $region32: #{tpu_custom_call.1} parent=1 // pred_region
      %79 = vsyncadd [#allocation9], 0
      %s80 = sshll.u32 %s7, 4
      %s81 = int_to_ptr.hbm [resolvable:$true] %s80
      %s82 = sshll.u32 [#allocation10], 4
      %s83 = int_to_ptr.vmem [resolvable:$true] %s82
      %88 = dma.hbm_to_vmem [thread:$0]  %s81, 1024, %s83, [#allocation9], 64, 64, 4
    $region33: #{tpu_custom_call.1} parent=1 // pred_fallthru
      _
    // Predicated region
    $region34: #{tpu_custom_call.1} parent=1 // pred_check
      _
    $region35: #{tpu_custom_call.1} parent=1 // pred_check_branch
      %90 = sbr.rel (0) target = $region37
    $region36: #{tpu_custom_call.1} parent=1 // pred_region
      _
    $region37: #{tpu_custom_call.1} parent=1 // pred_fallthru
      _
    // Predicated region
    $region38: #{tpu_custom_call.1} parent=1 // pred_check
      _
    $region39: #{tpu_custom_call.1} parent=1 // pred_check_branch
      %92 = sbr.rel (0) target = $region41
    $region40: #{tpu_custom_call.1} parent=1 // pred_region
      %94 = dma.done [#allocation3], 1024
    $region41: #{tpu_custom_call.1} parent=1 // pred_fallthru
      _
    // Predicated region
    $region42: #{tpu_custom_call.1} parent=1 // pred_check
      _
    $region43: #{tpu_custom_call.1} parent=1 // pred_check_branch
      %96 = sbr.rel (0) target = $region45
    $region44: #{tpu_custom_call.1} parent=1 // pred_region
      %98 = dma.done [#allocation6], 8192
    $region45: #{tpu_custom_call.1} parent=1 // pred_fallthru
      _
    // Predicated region
    $region46: #{tpu_custom_call.1} parent=1 // pred_check
      _
    $region47: #{tpu_custom_call.1} parent=1 // pred_check_branch
      %100 = sbr.rel (0) target = $region49
    $region48: #{tpu_custom_call.1} parent=1 // pred_region
      %102 = dma.done [#allocation6], 1024
    $region49: #{tpu_custom_call.1} parent=1 // pred_fallthru
      _
    // Predicated region
    $region50: #{tpu_custom_call.1} parent=1 // pred_check
      _
    $region51: #{tpu_custom_call.1} parent=1 // pred_check_branch
      %104 = sbr.rel (0) target = $region53
    $region52: #{tpu_custom_call.1} parent=1 // pred_region
      %106 = dma.done [#allocation9], 1024
    $region53: #{tpu_custom_call.1} parent=1 // pred_fallthru
      _
    // Predicated region
    $region54: #{tpu_custom_call.1} parent=1 // pred_check
      _
    $region55: #{tpu_custom_call.1} parent=1 // pred_check_branch
      %108 = sbr.rel (0) target = $region57
    $region56: #{tpu_custom_call.1} parent=1 // pred_region
      %110 = dma.done [#allocation9], 1024
    $region57: #{tpu_custom_call.1} parent=1 // pred_fallthru
      _
    %v111 = vld [vmem:[#allocation2] sm:$0xff]
    %v112 = vld [vmem:[#allocation2 + $0x8] sm:$0xff]
    %v113 = vld [vmem:[#allocation2 + $0x10] sm:$0xff]
    %v114 = vld [vmem:[#allocation2 + $0x18] sm:$0xff]
    %v115 = vld [vmem:[#allocation2 + $0x20] sm:$0xff]
    %v116 = vld [vmem:[#allocation2 + $0x28] sm:$0xff]
    %v117 = vld [vmem:[#allocation2 + $0x30] sm:$0xff]
    %v118 = vld [vmem:[#allocation2 + $0x38] sm:$0xff]
    %v119 = vld [vmem:[#allocation5] sm:$0xf]
    %v120 = vld [vmem:[#allocation5 + $0x4] sm:$0xf]
    %v121 = vld [vmem:[#allocation5 + $0x8] sm:$0xf]
    %v122 = vld [vmem:[#allocation5 + $0xc] sm:$0xf]
    %v123 = vld [vmem:[#allocation5 + $0x10] sm:$0xf]
    %v124 = vld [vmem:[#allocation5 + $0x14] sm:$0xf]
    %v125 = vld [vmem:[#allocation5 + $0x18] sm:$0xf]
    %v126 = vld [vmem:[#allocation5 + $0x1c] sm:$0xf]
    %v127 = vld [vmem:[#allocation5 + $0x20] sm:$0xf]
    %v128 = vld [vmem:[#allocation5 + $0x24] sm:$0xf]
    %v129 = vld [vmem:[#allocation5 + $0x28] sm:$0xf]
    %v130 = vld [vmem:[#allocation5 + $0x2c] sm:$0xf]
    %v131 = vld [vmem:[#allocation5 + $0x30] sm:$0xf]
    %v132 = vld [vmem:[#allocation5 + $0x34] sm:$0xf]
    %v133 = vld [vmem:[#allocation5 + $0x38] sm:$0xf]
    %v134 = vld [vmem:[#allocation5 + $0x3c] sm:$0xf]
    %v135 = vld [vmem:[#allocation5 + $0x40] sm:$0xf]
    %v136 = vld [vmem:[#allocation5 + $0x44] sm:$0xf]
    %v137 = vld [vmem:[#allocation5 + $0x48] sm:$0xf]
    %v138 = vld [vmem:[#allocation5 + $0x4c] sm:$0xf]
    %v139 = vld [vmem:[#allocation5 + $0x50] sm:$0xf]
    %v140 = vld [vmem:[#allocation5 + $0x54] sm:$0xf]
    %v141 = vld [vmem:[#allocation5 + $0x58] sm:$0xf]
    %v142 = vld [vmem:[#allocation5 + $0x5c] sm:$0xf]
    %v143 = vld [vmem:[#allocation5 + $0x60] sm:$0xf]
    %v144 = vld [vmem:[#allocation5 + $0x64] sm:$0xf]
    %v145 = vld [vmem:[#allocation5 + $0x68] sm:$0xf]
    %v146 = vld [vmem:[#allocation5 + $0x6c] sm:$0xf]
    %v147 = vld [vmem:[#allocation5 + $0x70] sm:$0xf]
    %v148 = vld [vmem:[#allocation5 + $0x74] sm:$0xf]
    %v149 = vld [vmem:[#allocation5 + $0x78] sm:$0xf]
    %v150 = vld [vmem:[#allocation5 + $0x7c] sm:$0xf]
    %v151 = vld [vmem:[#allocation5 + $0x80] sm:$0xf]
    %v152 = vld [vmem:[#allocation5 + $0x84] sm:$0xf]
    %v153 = vld [vmem:[#allocation5 + $0x88] sm:$0xf]
    %v154 = vld [vmem:[#allocation5 + $0x8c] sm:$0xf]
    %v155 = vld [vmem:[#allocation5 + $0x90] sm:$0xf]
    %v156 = vld [vmem:[#allocation5 + $0x94] sm:$0xf]
    %v157 = vld [vmem:[#allocation5 + $0x98] sm:$0xf]
    %v158 = vld [vmem:[#allocation5 + $0x9c] sm:$0xf]
    %v159 = vld [vmem:[#allocation5 + $0xa0] sm:$0xf]
    %v160 = vld [vmem:[#allocation5 + $0xa4] sm:$0xf]
    %v161 = vld [vmem:[#allocation5 + $0xa8] sm:$0xf]
    %v162 = vld [vmem:[#allocation5 + $0xac] sm:$0xf]
    %v163 = vld [vmem:[#allocation5 + $0xb0] sm:$0xf]
    %v164 = vld [vmem:[#allocation5 + $0xb4] sm:$0xf]
    %v165 = vld [vmem:[#allocation5 + $0xb8] sm:$0xf]
    %v166 = vld [vmem:[#allocation5 + $0xbc] sm:$0xf]
    %v167 = vld [vmem:[#allocation5 + $0xc0] sm:$0xf]
    %v168 = vld [vmem:[#allocation5 + $0xc4] sm:$0xf]
    %v169 = vld [vmem:[#allocation5 + $0xc8] sm:$0xf]
    %v170 = vld [vmem:[#allocation5 + $0xcc] sm:$0xf]
    %v171 = vld [vmem:[#allocation5 + $0xd0] sm:$0xf]
    %v172 = vld [vmem:[#allocation5 + $0xd4] sm:$0xf]
    %v173 = vld [vmem:[#allocation5 + $0xd8] sm:$0xf]
    %v174 = vld [vmem:[#allocation5 + $0xdc] sm:$0xf]
    %v175 = vld [vmem:[#allocation5 + $0xe0] sm:$0xf]
    %v176 = vld [vmem:[#allocation5 + $0xe4] sm:$0xf]
    %v177 = vld [vmem:[#allocation5 + $0xe8] sm:$0xf]
    %v178 = vld [vmem:[#allocation5 + $0xec] sm:$0xf]
    %v179 = vld [vmem:[#allocation5 + $0xf0] sm:$0xf]
    %v180 = vld [vmem:[#allocation5 + $0xf4] sm:$0xf]
    %v181 = vld [vmem:[#allocation5 + $0xf8] sm:$0xf]
    %v182 = vld [vmem:[#allocation5 + $0xfc] sm:$0xf]
    %v183 = vld [vmem:[#allocation5 + $0x100] sm:$0xf]
    %v184 = vld [vmem:[#allocation5 + $0x104] sm:$0xf]
    %v185 = vld [vmem:[#allocation5 + $0x108] sm:$0xf]
    %v186 = vld [vmem:[#allocation5 + $0x10c] sm:$0xf]
    %v187 = vld [vmem:[#allocation5 + $0x110] sm:$0xf]
    %v188 = vld [vmem:[#allocation5 + $0x114] sm:$0xf]
    %v189 = vld [vmem:[#allocation5 + $0x118] sm:$0xf]
    %v190 = vld [vmem:[#allocation5 + $0x11c] sm:$0xf]
    %v191 = vld [vmem:[#allocation5 + $0x120] sm:$0xf]
    %v192 = vld [vmem:[#allocation5 + $0x124] sm:$0xf]
    %v193 = vld [vmem:[#allocation5 + $0x128] sm:$0xf]
    %v194 = vld [vmem:[#allocation5 + $0x12c] sm:$0xf]
    %v195 = vld [vmem:[#allocation5 + $0x130] sm:$0xf]
    %v196 = vld [vmem:[#allocation5 + $0x134] sm:$0xf]
    %v197 = vld [vmem:[#allocation5 + $0x138] sm:$0xf]
    %v198 = vld [vmem:[#allocation5 + $0x13c] sm:$0xf]
    %v199 = vld [vmem:[#allocation5 + $0x140] sm:$0xf]
    %v200 = vld [vmem:[#allocation5 + $0x144] sm:$0xf]
    %v201 = vld [vmem:[#allocation5 + $0x148] sm:$0xf]
    %v202 = vld [vmem:[#allocation5 + $0x14c] sm:$0xf]
    %v203 = vld [vmem:[#allocation5 + $0x150] sm:$0xf]
    %v204 = vld [vmem:[#allocation5 + $0x154] sm:$0xf]
    %v205 = vld [vmem:[#allocation5 + $0x158] sm:$0xf]
    %v206 = vld [vmem:[#allocation5 + $0x15c] sm:$0xf]
    %v207 = vld [vmem:[#allocation5 + $0x160] sm:$0xf]
    %v208 = vld [vmem:[#allocation5 + $0x164] sm:$0xf]
    %v209 = vld [vmem:[#allocation5 + $0x168] sm:$0xf]
    %v210 = vld [vmem:[#allocation5 + $0x16c] sm:$0xf]
    %v211 = vld [vmem:[#allocation5 + $0x170] sm:$0xf]
    %v212 = vld [vmem:[#allocation5 + $0x174] sm:$0xf]
    %v213 = vld [vmem:[#allocation5 + $0x178] sm:$0xf]
    %v214 = vld [vmem:[#allocation5 + $0x17c] sm:$0xf]
    %v215 = vld [vmem:[#allocation5 + $0x180] sm:$0xf]
    %v216 = vld [vmem:[#allocation5 + $0x184] sm:$0xf]
    %v217 = vld [vmem:[#allocation5 + $0x188] sm:$0xf]
    %v218 = vld [vmem:[#allocation5 + $0x18c] sm:$0xf]
    %v219 = vld [vmem:[#allocation5 + $0x190] sm:$0xf]
    %v220 = vld [vmem:[#allocation5 + $0x194] sm:$0xf]
    %v221 = vld [vmem:[#allocation5 + $0x198] sm:$0xf]
    %v222 = vld [vmem:[#allocation5 + $0x19c] sm:$0xf]
    %v223 = vld [vmem:[#allocation5 + $0x1a0] sm:$0xf]
    %v224 = vld [vmem:[#allocation5 + $0x1a4] sm:$0xf]
    %v225 = vld [vmem:[#allocation5 + $0x1a8] sm:$0xf]
    %v226 = vld [vmem:[#allocation5 + $0x1ac] sm:$0xf]
    %v227 = vld [vmem:[#allocation5 + $0x1b0] sm:$0xf]
    %v228 = vld [vmem:[#allocation5 + $0x1b4] sm:$0xf]
    %v229 = vld [vmem:[#allocation5 + $0x1b8] sm:$0xf]
    %v230 = vld [vmem:[#allocation5 + $0x1bc] sm:$0xf]
    %v231 = vld [vmem:[#allocation5 + $0x1c0] sm:$0xf]
    %v232 = vld [vmem:[#allocation5 + $0x1c4] sm:$0xf]
    %v233 = vld [vmem:[#allocation5 + $0x1c8] sm:$0xf]
    %v234 = vld [vmem:[#allocation5 + $0x1cc] sm:$0xf]
    %v235 = vld [vmem:[#allocation5 + $0x1d0] sm:$0xf]
    %v236 = vld [vmem:[#allocation5 + $0x1d4] sm:$0xf]
    %v237 = vld [vmem:[#allocation5 + $0x1d8] sm:$0xf]
    %v238 = vld [vmem:[#allocation5 + $0x1dc] sm:$0xf]
    %v239 = vld [vmem:[#allocation5 + $0x1e0] sm:$0xf]
    %v240 = vld [vmem:[#allocation5 + $0x1e4] sm:$0xf]
    %v241 = vld [vmem:[#allocation5 + $0x1e8] sm:$0xf]
    %v242 = vld [vmem:[#allocation5 + $0x1ec] sm:$0xf]
    %v243 = vld [vmem:[#allocation5 + $0x1f0] sm:$0xf]
    %v244 = vld [vmem:[#allocation5 + $0x1f4] sm:$0xf]
    %v245 = vld [vmem:[#allocation5 + $0x1f8] sm:$0xf]
    %v246 = vld [vmem:[#allocation5 + $0x1fc] sm:$0xf]
    %v247 = vld [vmem:[%s2] sm:$0x1]
    %v249 = vperm.slane %v247, 0
    %v259 = vunpack.c.l.b16 %v111
    %v260 = vunpack.c.h.b16 %v111
    %v261 = vunpack.c.l.b16 %v112
    %v262 = vunpack.c.h.b16 %v112
    %v263 = vunpack.c.l.b16 %v113
    %v264 = vunpack.c.h.b16 %v113
    %v265 = vunpack.c.l.b16 %v114
    %v266 = vunpack.c.h.b16 %v114
    %v267 = vunpack.c.l.b16 %v115
    %v268 = vunpack.c.h.b16 %v115
    %v269 = vunpack.c.l.b16 %v116
    %v270 = vunpack.c.h.b16 %v116
    %v271 = vunpack.c.l.b16 %v117
    %v272 = vunpack.c.h.b16 %v117
    %v273 = vunpack.c.l.b16 %v118
    %v274 = vunpack.c.h.b16 %v118
    %v275 = vpack.c.b16 %v267, %v259
    %v276 = vpack.c.b16 %v268, %v260
    %v277 = vpack.c.b16 %v269, %v261
    %v278 = vpack.c.b16 %v270, %v262
    %v279 = vpack.c.b16 %v271, %v263
    %v280 = vpack.c.b16 %v272, %v264
    %v281 = vpack.c.b16 %v273, %v265
    %v282 = vpack.c.b16 %v274, %v266
    %v419 = vunpack.c.l.b16 %v119
    %v420 = vunpack.c.l.b16 %v120
    %v421 = vunpack.c.l.b16 %v121
    %v422 = vunpack.c.l.b16 %v122
    %v423 = vunpack.c.l.b16 %v123
    %v424 = vunpack.c.l.b16 %v124
    %v425 = vunpack.c.l.b16 %v125
    %v426 = vunpack.c.l.b16 %v126
    %v427 = vunpack.c.l.b16 %v127
    %v428 = vunpack.c.l.b16 %v128
    %v429 = vunpack.c.l.b16 %v129
    %v430 = vunpack.c.l.b16 %v130
    %v431 = vunpack.c.l.b16 %v131
    %v432 = vunpack.c.l.b16 %v132
    %v433 = vunpack.c.l.b16 %v133
    %v434 = vunpack.c.l.b16 %v134
    %v435 = vunpack.c.l.b16 %v135
    %v436 = vunpack.c.l.b16 %v136
    %v437 = vunpack.c.l.b16 %v137
    %v438 = vunpack.c.l.b16 %v138
    %v439 = vunpack.c.l.b16 %v139
    %v440 = vunpack.c.l.b16 %v140
    %v441 = vunpack.c.l.b16 %v141
    %v442 = vunpack.c.l.b16 %v142
    %v443 = vunpack.c.l.b16 %v143
    %v444 = vunpack.c.l.b16 %v144
    %v445 = vunpack.c.l.b16 %v145
    %v446 = vunpack.c.l.b16 %v146
    %v447 = vunpack.c.l.b16 %v147
    %v448 = vunpack.c.l.b16 %v148
    %v449 = vunpack.c.l.b16 %v149
    %v450 = vunpack.c.l.b16 %v150
    %v451 = vunpack.c.l.b16 %v151
    %v452 = vunpack.c.l.b16 %v152
    %v453 = vunpack.c.l.b16 %v153
    %v454 = vunpack.c.l.b16 %v154
    %v455 = vunpack.c.l.b16 %v155
    %v456 = vunpack.c.l.b16 %v156
    %v457 = vunpack.c.l.b16 %v157
    %v458 = vunpack.c.l.b16 %v158
    %v459 = vunpack.c.l.b16 %v159
    %v460 = vunpack.c.l.b16 %v160
    %v461 = vunpack.c.l.b16 %v161
    %v462 = vunpack.c.l.b16 %v162
    %v463 = vunpack.c.l.b16 %v163
    %v464 = vunpack.c.l.b16 %v164
    %v465 = vunpack.c.l.b16 %v165
    %v466 = vunpack.c.l.b16 %v166
    %v467 = vunpack.c.l.b16 %v167
    %v468 = vunpack.c.l.b16 %v168
    %v469 = vunpack.c.l.b16 %v169
    %v470 = vunpack.c.l.b16 %v170
    %v471 = vunpack.c.l.b16 %v171
    %v472 = vunpack.c.l.b16 %v172
    %v473 = vunpack.c.l.b16 %v173
    %v474 = vunpack.c.l.b16 %v174
    %v475 = vunpack.c.l.b16 %v175
    %v476 = vunpack.c.l.b16 %v176
    %v477 = vunpack.c.l.b16 %v177
    %v478 = vunpack.c.l.b16 %v178
    %v479 = vunpack.c.l.b16 %v179
    %v480 = vunpack.c.l.b16 %v180
    %v481 = vunpack.c.l.b16 %v181
    %v482 = vunpack.c.l.b16 %v182
    %v483 = vunpack.c.l.b16 %v183
    %v484 = vunpack.c.l.b16 %v184
    %v485 = vunpack.c.l.b16 %v185
    %v486 = vunpack.c.l.b16 %v186
    %v487 = vunpack.c.l.b16 %v187
    %v488 = vunpack.c.l.b16 %v188
    %v489 = vunpack.c.l.b16 %v189
    %v490 = vunpack.c.l.b16 %v190
    %v491 = vunpack.c.l.b16 %v191
    %v492 = vunpack.c.l.b16 %v192
    %v493 = vunpack.c.l.b16 %v193
    %v494 = vunpack.c.l.b16 %v194
    %v495 = vunpack.c.l.b16 %v195
    %v496 = vunpack.c.l.b16 %v196
    %v497 = vunpack.c.l.b16 %v197
    %v498 = vunpack.c.l.b16 %v198
    %v499 = vunpack.c.l.b16 %v199
    %v500 = vunpack.c.l.b16 %v200
    %v501 = vunpack.c.l.b16 %v201
    %v502 = vunpack.c.l.b16 %v202
    %v503 = vunpack.c.l.b16 %v203
    %v504 = vunpack.c.l.b16 %v204
    %v505 = vunpack.c.l.b16 %v205
    %v506 = vunpack.c.l.b16 %v206
    %v507 = vunpack.c.l.b16 %v207
    %v508 = vunpack.c.l.b16 %v208
    %v509 = vunpack.c.l.b16 %v209
    %v510 = vunpack.c.l.b16 %v210
    %v511 = vunpack.c.l.b16 %v211
    %v512 = vunpack.c.l.b16 %v212
    %v513 = vunpack.c.l.b16 %v213
    %v514 = vunpack.c.l.b16 %v214
    %v515 = vunpack.c.l.b16 %v215
    %v516 = vunpack.c.l.b16 %v216
    %v517 = vunpack.c.l.b16 %v217
    %v518 = vunpack.c.l.b16 %v218
    %v519 = vunpack.c.l.b16 %v219
    %v520 = vunpack.c.l.b16 %v220
    %v521 = vunpack.c.l.b16 %v221
    %v522 = vunpack.c.l.b16 %v222
    %v523 = vunpack.c.l.b16 %v223
    %v524 = vunpack.c.l.b16 %v224
    %v525 = vunpack.c.l.b16 %v225
    %v526 = vunpack.c.l.b16 %v226
    %v527 = vunpack.c.l.b16 %v227
    %v528 = vunpack.c.l.b16 %v228
    %v529 = vunpack.c.l.b16 %v229
    %v530 = vunpack.c.l.b16 %v230
    %v531 = vunpack.c.l.b16 %v231
    %v532 = vunpack.c.l.b16 %v232
    %v533 = vunpack.c.l.b16 %v233
    %v534 = vunpack.c.l.b16 %v234
    %v535 = vunpack.c.l.b16 %v235
    %v536 = vunpack.c.l.b16 %v236
    %v537 = vunpack.c.l.b16 %v237
    %v538 = vunpack.c.l.b16 %v238
    %v539 = vunpack.c.l.b16 %v239
    %v540 = vunpack.c.l.b16 %v240
    %v541 = vunpack.c.l.b16 %v241
    %v542 = vunpack.c.l.b16 %v242
    %v543 = vunpack.c.l.b16 %v243
    %v544 = vunpack.c.l.b16 %v244
    %v545 = vunpack.c.l.b16 %v245
    %v546 = vunpack.c.l.b16 %v246
    %v547 = vpack.c.b16 %v420, %v419
    %v548 = vpack.c.b16 %v422, %v421
    %v549 = vpack.c.b16 %v424, %v423
    %v550 = vpack.c.b16 %v426, %v425
    %v551 = vpack.c.b16 %v428, %v427
    %v552 = vpack.c.b16 %v430, %v429
    %v553 = vpack.c.b16 %v432, %v431
    %v554 = vpack.c.b16 %v434, %v433
    %v555 = vpack.c.b16 %v436, %v435
    %v556 = vpack.c.b16 %v438, %v437
    %v557 = vpack.c.b16 %v440, %v439
    %v558 = vpack.c.b16 %v442, %v441
    %v559 = vpack.c.b16 %v444, %v443
    %v560 = vpack.c.b16 %v446, %v445
    %v561 = vpack.c.b16 %v448, %v447
    %v562 = vpack.c.b16 %v450, %v449
    %v563 = vpack.c.b16 %v452, %v451
    %v564 = vpack.c.b16 %v454, %v453
    %v565 = vpack.c.b16 %v456, %v455
    %v566 = vpack.c.b16 %v458, %v457
    %v567 = vpack.c.b16 %v460, %v459
    %v568 = vpack.c.b16 %v462, %v461
    %v569 = vpack.c.b16 %v464, %v463
    %v570 = vpack.c.b16 %v466, %v465
    %v571 = vpack.c.b16 %v468, %v467
    %v572 = vpack.c.b16 %v470, %v469
    %v573 = vpack.c.b16 %v472, %v471
    %v574 = vpack.c.b16 %v474, %v473
    %v575 = vpack.c.b16 %v476, %v475
    %v576 = vpack.c.b16 %v478, %v477
    %v577 = vpack.c.b16 %v480, %v479
    %v578 = vpack.c.b16 %v482, %v481
    %v579 = vpack.c.b16 %v484, %v483
    %v580 = vpack.c.b16 %v486, %v485
    %v581 = vpack.c.b16 %v488, %v487
    %v582 = vpack.c.b16 %v490, %v489
    %v583 = vpack.c.b16 %v492, %v491
    %v584 = vpack.c.b16 %v494, %v493
    %v585 = vpack.c.b16 %v496, %v495
    %v586 = vpack.c.b16 %v498, %v497
    %v587 = vpack.c.b16 %v500, %v499
    %v588 = vpack.c.b16 %v502, %v501
    %v589 = vpack.c.b16 %v504, %v503
    %v590 = vpack.c.b16 %v506, %v505
    %v591 = vpack.c.b16 %v508, %v507
    %v592 = vpack.c.b16 %v510, %v509
    %v593 = vpack.c.b16 %v512, %v511
    %v594 = vpack.c.b16 %v514, %v513
    %v595 = vpack.c.b16 %v516, %v515
    %v596 = vpack.c.b16 %v518, %v517
    %v597 = vpack.c.b16 %v520, %v519
    %v598 = vpack.c.b16 %v522, %v521
    %v599 = vpack.c.b16 %v524, %v523
    %v600 = vpack.c.b16 %v526, %v525
    %v601 = vpack.c.b16 %v528, %v527
    %v602 = vpack.c.b16 %v530, %v529
    %v603 = vpack.c.b16 %v532, %v531
    %v604 = vpack.c.b16 %v534, %v533
    %v605 = vpack.c.b16 %v536, %v535
    %v606 = vpack.c.b16 %v538, %v537
    %v607 = vpack.c.b16 %v540, %v539
    %v608 = vpack.c.b16 %v542, %v541
    %v609 = vpack.c.b16 %v544, %v543
    %v610 = vpack.c.b16 %v546, %v545
    %675 = vmatpush.bf16.msra.mxu0 %v554
    %676 = vmatpush.bf16.msra.mxu0 %v553
    %677 = vmatpush.bf16.msra.mxu0 %v552
    %678 = vmatpush.bf16.msra.mxu0 %v551
    %679 = vmatpush.bf16.msra.mxu0 %v550
    %680 = vmatpush.bf16.msra.mxu0 %v549
    %681 = vmatpush.bf16.msra.mxu0 %v548
    %682 = vmatpush.bf16.msra.mxu0 %v547
    %683 = vmatmul.bf16.gmra.mxu0 %v275
    %v684 = vpop.f32.mrf.mxu0
    %v685 = vadd.f32 %v249, %v684
    %v686 = vpop.f32.mrf.mxu0
    %v687 = vadd.f32 %v249, %v686
    %688 = vdwg.mxu0
    %689 = vmatpush.bf16.msra.mxu0 %v562
    %690 = vmatpush.bf16.msra.mxu0 %v561
    %691 = vmatpush.bf16.msra.mxu0 %v560
    %692 = vmatpush.bf16.msra.mxu0 %v559
    %693 = vmatpush.bf16.msra.mxu0 %v558
    %694 = vmatpush.bf16.msra.mxu0 %v557
    %695 = vmatpush.bf16.msra.mxu0 %v556
    %696 = vmatpush.bf16.msra.mxu0 %v555
    %697 = vmatmul.bf16.gmra.mxu0 %v276
    %v698 = vpop.f32.mrf.mxu0
    %v699 = vadd.f32 %v685, %v698
    %v700 = vpop.f32.mrf.mxu0
    %v701 = vadd.f32 %v687, %v700
    %702 = vdwg.mxu0
    %703 = vmatpush.bf16.msra.mxu0 %v570
    %704 = vmatpush.bf16.msra.mxu0 %v569
    %705 = vmatpush.bf16.msra.mxu0 %v568
    %706 = vmatpush.bf16.msra.mxu0 %v567
    %707 = vmatpush.bf16.msra.mxu0 %v566
    %708 = vmatpush.bf16.msra.mxu0 %v565
    %709 = vmatpush.bf16.msra.mxu0 %v564
    %710 = vmatpush.bf16.msra.mxu0 %v563
    %711 = vmatmul.bf16.gmra.mxu0 %v277
    %v712 = vpop.f32.mrf.mxu0
    %v713 = vadd.f32 %v699, %v712
    %v714 = vpop.f32.mrf.mxu0
    %v715 = vadd.f32 %v701, %v714
    %716 = vdwg.mxu0
    %717 = vmatpush.bf16.msra.mxu0 %v578
    %718 = vmatpush.bf16.msra.mxu0 %v577
    %719 = vmatpush.bf16.msra.mxu0 %v576
    %720 = vmatpush.bf16.msra.mxu0 %v575
    %721 = vmatpush.bf16.msra.mxu0 %v574
    %722 = vmatpush.bf16.msra.mxu0 %v573
    %723 = vmatpush.bf16.msra.mxu0 %v572
    %724 = vmatpush.bf16.msra.mxu0 %v571
    %725 = vmatmul.bf16.gmra.mxu0 %v278
    %v726 = vpop.f32.mrf.mxu0
    %v727 = vadd.f32 %v713, %v726
    %v728 = vpop.f32.mrf.mxu0
    %v729 = vadd.f32 %v715, %v728
    %730 = vdwg.mxu0
    %731 = vmatpush.bf16.msra.mxu0 %v586
    %732 = vmatpush.bf16.msra.mxu0 %v585
    %733 = vmatpush.bf16.msra.mxu0 %v584
    %734 = vmatpush.bf16.msra.mxu0 %v583
    %735 = vmatpush.bf16.msra.mxu0 %v582
    %736 = vmatpush.bf16.msra.mxu0 %v581
    %737 = vmatpush.bf16.msra.mxu0 %v580
    %738 = vmatpush.bf16.msra.mxu0 %v579
    %739 = vmatmul.bf16.gmra.mxu0 %v279
    %v740 = vpop.f32.mrf.mxu0
    %v741 = vadd.f32 %v727, %v740
    %v742 = vpop.f32.mrf.mxu0
    %v743 = vadd.f32 %v729, %v742
    %744 = vdwg.mxu0
    %745 = vmatpush.bf16.msra.mxu0 %v594
    %746 = vmatpush.bf16.msra.mxu0 %v593
    %747 = vmatpush.bf16.msra.mxu0 %v592
    %748 = vmatpush.bf16.msra.mxu0 %v591
    %749 = vmatpush.bf16.msra.mxu0 %v590
    %750 = vmatpush.bf16.msra.mxu0 %v589
    %751 = vmatpush.bf16.msra.mxu0 %v588
    %752 = vmatpush.bf16.msra.mxu0 %v587
    %753 = vmatmul.bf16.gmra.mxu0 %v280
    %v754 = vpop.f32.mrf.mxu0
    %v755 = vadd.f32 %v741, %v754
    %v756 = vpop.f32.mrf.mxu0
    %v757 = vadd.f32 %v743, %v756
    %758 = vdwg.mxu0
    %759 = vmatpush.bf16.msra.mxu0 %v602
    %760 = vmatpush.bf16.msra.mxu0 %v601
    %761 = vmatpush.bf16.msra.mxu0 %v600
    %762 = vmatpush.bf16.msra.mxu0 %v599
    %763 = vmatpush.bf16.msra.mxu0 %v598
    %764 = vmatpush.bf16.msra.mxu0 %v597
    %765 = vmatpush.bf16.msra.mxu0 %v596
    %766 = vmatpush.bf16.msra.mxu0 %v595
    %767 = vmatmul.bf16.gmra.mxu0 %v281
    %v768 = vpop.f32.mrf.mxu0
    %v769 = vadd.f32 %v755, %v768
    %v770 = vpop.f32.mrf.mxu0
    %v771 = vadd.f32 %v757, %v770
    %772 = vdwg.mxu0
    %773 = vmatpush.bf16.msra.mxu0 %v610
    %774 = vmatpush.bf16.msra.mxu0 %v609
    %775 = vmatpush.bf16.msra.mxu0 %v608
    %776 = vmatpush.bf16.msra.mxu0 %v607
    %777 = vmatpush.bf16.msra.mxu0 %v606
    %778 = vmatpush.bf16.msra.mxu0 %v605
    %779 = vmatpush.bf16.msra.mxu0 %v604
    %780 = vmatpush.bf16.msra.mxu0 %v603
    %781 = vmatmul.bf16.gmra.mxu0 %v282
    %v782 = vpop.f32.mrf.mxu0
    %v783 = vadd.f32 %v769, %v782
    %v784 = vpop.f32.mrf.mxu0
    %v785 = vadd.f32 %v771, %v784
    %786 = vdwg.mxu0
    %v787 = vmax.f32 %v783, 0.0
    %v788 = vmax.f32 %v785, 0.0
    %v789 = vpack.c.bf16 %v788, %v787
    %v790 = vld [vmem:[#allocation7] sm:$0xf]
    %v791 = vld [vmem:[#allocation7 + $0x4] sm:$0xf]
    %v792 = vld [vmem:[#allocation7 + $0x8] sm:$0xf]
    %v793 = vld [vmem:[#allocation7 + $0xc] sm:$0xf]
    %v794 = vld [vmem:[#allocation7 + $0x10] sm:$0xf]
    %v795 = vld [vmem:[#allocation7 + $0x14] sm:$0xf]
    %v796 = vld [vmem:[#allocation7 + $0x18] sm:$0xf]
    %v797 = vld [vmem:[#allocation7 + $0x1c] sm:$0xf]
    %v798 = vld [vmem:[#allocation7 + $0x20] sm:$0xf]
    %v799 = vld [vmem:[#allocation7 + $0x24] sm:$0xf]
    %v800 = vld [vmem:[#allocation7 + $0x28] sm:$0xf]
    %v801 = vld [vmem:[#allocation7 + $0x2c] sm:$0xf]
    %v802 = vld [vmem:[#allocation7 + $0x30] sm:$0xf]
    %v803 = vld [vmem:[#allocation7 + $0x34] sm:$0xf]
    %v804 = vld [vmem:[#allocation7 + $0x38] sm:$0xf]
    %v805 = vld [vmem:[#allocation7 + $0x3c] sm:$0xf]
    %v806 = vld [vmem:[%s4] sm:$0x1]
    %v808 = vperm.slane %v806, 0
    %v826 = vunpack.c.l.b16 %v790
    %v827 = vunpack.c.l.b16 %v791
    %v828 = vunpack.c.l.b16 %v792
    %v829 = vunpack.c.l.b16 %v793
    %v830 = vunpack.c.l.b16 %v794
    %v831 = vunpack.c.l.b16 %v795
    %v832 = vunpack.c.l.b16 %v796
    %v833 = vunpack.c.l.b16 %v797
    %v834 = vunpack.c.l.b16 %v798
    %v835 = vunpack.c.l.b16 %v799
    %v836 = vunpack.c.l.b16 %v800
    %v837 = vunpack.c.l.b16 %v801
    %v838 = vunpack.c.l.b16 %v802
    %v839 = vunpack.c.l.b16 %v803
    %v840 = vunpack.c.l.b16 %v804
    %v841 = vunpack.c.l.b16 %v805
    %v842 = vpack.c.b16 %v827, %v826
    %v843 = vpack.c.b16 %v829, %v828
    %v844 = vpack.c.b16 %v831, %v830
    %v845 = vpack.c.b16 %v833, %v832
    %v846 = vpack.c.b16 %v835, %v834
    %v847 = vpack.c.b16 %v837, %v836
    %v848 = vpack.c.b16 %v839, %v838
    %v849 = vpack.c.b16 %v841, %v840
    %858 = vmatpush.bf16.msra.mxu0 %v849
    %859 = vmatpush.bf16.msra.mxu0 %v848
    %860 = vmatpush.bf16.msra.mxu0 %v847
    %861 = vmatpush.bf16.msra.mxu0 %v846
    %862 = vmatpush.bf16.msra.mxu0 %v845
    %863 = vmatpush.bf16.msra.mxu0 %v844
    %864 = vmatpush.bf16.msra.mxu0 %v843
    %865 = vmatpush.bf16.msra.mxu0 %v842
    %866 = vmatmul.bf16.gmra.mxu0 %v789
    %v867 = vpop.f32.mrf.mxu0
    %v868 = vadd.f32 %v808, %v867
    %v869 = vpop.f32.mrf.mxu0
    %v870 = vadd.f32 %v808, %v869
    %871 = vdwg.mxu0
    %v872 = vmax.f32 %v868, 0.0
    %v873 = vmax.f32 %v870, 0.0
    %v874 = vpack.c.bf16 %v873, %v872
    %v875 = vld [vmem:[#allocation8] sm:$0xf]
    %v876 = vld [vmem:[#allocation8 + $0x4] sm:$0xf]
    %v877 = vld [vmem:[#allocation8 + $0x8] sm:$0xf]
    %v878 = vld [vmem:[#allocation8 + $0xc] sm:$0xf]
    %v879 = vld [vmem:[#allocation8 + $0x10] sm:$0xf]
    %v880 = vld [vmem:[#allocation8 + $0x14] sm:$0xf]
    %v881 = vld [vmem:[#allocation8 + $0x18] sm:$0xf]
    %v882 = vld [vmem:[#allocation8 + $0x1c] sm:$0xf]
    %v883 = vld [vmem:[#allocation8 + $0x20] sm:$0xf]
    %v884 = vld [vmem:[#allocation8 + $0x24] sm:$0xf]
    %v885 = vld [vmem:[#allocation8 + $0x28] sm:$0xf]
    %v886 = vld [vmem:[#allocation8 + $0x2c] sm:$0xf]
    %v887 = vld [vmem:[#allocation8 + $0x30] sm:$0xf]
    %v888 = vld [vmem:[#allocation8 + $0x34] sm:$0xf]
    %v889 = vld [vmem:[#allocation8 + $0x38] sm:$0xf]
    %v890 = vld [vmem:[#allocation8 + $0x3c] sm:$0xf]
    %v891 = vld [vmem:[%s6] sm:$0x1]
    %v893 = vperm.slane %v891, 0
    %v911 = vunpack.c.l.b16 %v875
    %v912 = vunpack.c.l.b16 %v876
    %v913 = vunpack.c.l.b16 %v877
    %v914 = vunpack.c.l.b16 %v878
    %v915 = vunpack.c.l.b16 %v879
    %v916 = vunpack.c.l.b16 %v880
    %v917 = vunpack.c.l.b16 %v881
    %v918 = vunpack.c.l.b16 %v882
    %v919 = vunpack.c.l.b16 %v883
    %v920 = vunpack.c.l.b16 %v884
    %v921 = vunpack.c.l.b16 %v885
    %v922 = vunpack.c.l.b16 %v886
    %v923 = vunpack.c.l.b16 %v887
    %v924 = vunpack.c.l.b16 %v888
    %v925 = vunpack.c.l.b16 %v889
    %v926 = vunpack.c.l.b16 %v890
    %v927 = vpack.c.b16 %v912, %v911
    %v928 = vpack.c.b16 %v914, %v913
    %v929 = vpack.c.b16 %v916, %v915
    %v930 = vpack.c.b16 %v918, %v917
    %v931 = vpack.c.b16 %v920, %v919
    %v932 = vpack.c.b16 %v922, %v921
    %v933 = vpack.c.b16 %v924, %v923
    %v934 = vpack.c.b16 %v926, %v925
    %943 = vmatpush.bf16.msra.mxu0 %v934
    %944 = vmatpush.bf16.msra.mxu0 %v933
    %945 = vmatpush.bf16.msra.mxu0 %v932
    %946 = vmatpush.bf16.msra.mxu0 %v931
    %947 = vmatpush.bf16.msra.mxu0 %v930
    %948 = vmatpush.bf16.msra.mxu0 %v929
    %949 = vmatpush.bf16.msra.mxu0 %v928
    %950 = vmatpush.bf16.msra.mxu0 %v927
    %951 = vmatmul.bf16.gmra.mxu0 %v874
    %v952 = vpop.f32.mrf.mxu0
    %v953 = vadd.f32 %v893, %v952
    %v954 = vpop.f32.mrf.mxu0
    %v955 = vadd.f32 %v893, %v954
    %956 = vdwg.mxu0
    %v957 = vmax.f32 %v953, 0.0
    %v958 = vmax.f32 %v955, 0.0
    %v959 = vpack.c.bf16 %v958, %v957
    %v960 = vld [vmem:[#allocation10] sm:$0xf]
    %v961 = vld [vmem:[#allocation10 + $0x4] sm:$0xf]
    %v962 = vld [vmem:[#allocation10 + $0x8] sm:$0xf]
    %v963 = vld [vmem:[#allocation10 + $0xc] sm:$0xf]
    %v964 = vld [vmem:[#allocation10 + $0x10] sm:$0xf]
    %v965 = vld [vmem:[#allocation10 + $0x14] sm:$0xf]
    %v966 = vld [vmem:[#allocation10 + $0x18] sm:$0xf]
    %v967 = vld [vmem:[#allocation10 + $0x1c] sm:$0xf]
    %v968 = vld [vmem:[#allocation10 + $0x20] sm:$0xf]
    %v969 = vld [vmem:[#allocation10 + $0x24] sm:$0xf]
    %v970 = vld [vmem:[#allocation10 + $0x28] sm:$0xf]
    %v971 = vld [vmem:[#allocation10 + $0x2c] sm:$0xf]
    %v972 = vld [vmem:[#allocation10 + $0x30] sm:$0xf]
    %v973 = vld [vmem:[#allocation10 + $0x34] sm:$0xf]
    %v974 = vld [vmem:[#allocation10 + $0x38] sm:$0xf]
    %v975 = vld [vmem:[#allocation10 + $0x3c] sm:$0xf]
    %v976 = vld [vmem:[%s8] sm:$0x1]
    %v978 = vperm.slane %v976, 0
    %v996 = vunpack.c.l.b16 %v960
    %v997 = vunpack.c.l.b16 %v961
    %v998 = vunpack.c.l.b16 %v962
    %v999 = vunpack.c.l.b16 %v963
    %v1000 = vunpack.c.l.b16 %v964
    %v1001 = vunpack.c.l.b16 %v965
    %v1002 = vunpack.c.l.b16 %v966
    %v1003 = vunpack.c.l.b16 %v967
    %v1004 = vunpack.c.l.b16 %v968
    %v1005 = vunpack.c.l.b16 %v969
    %v1006 = vunpack.c.l.b16 %v970
    %v1007 = vunpack.c.l.b16 %v971
    %v1008 = vunpack.c.l.b16 %v972
    %v1009 = vunpack.c.l.b16 %v973
    %v1010 = vunpack.c.l.b16 %v974
    %v1011 = vunpack.c.l.b16 %v975
    %v1012 = vpack.c.b16 %v997, %v996
    %v1013 = vpack.c.b16 %v999, %v998
    %v1014 = vpack.c.b16 %v1001, %v1000
    %v1015 = vpack.c.b16 %v1003, %v1002
    %v1016 = vpack.c.b16 %v1005, %v1004
    %v1017 = vpack.c.b16 %v1007, %v1006
    %v1018 = vpack.c.b16 %v1009, %v1008
    %v1019 = vpack.c.b16 %v1011, %v1010
    %1028 = vmatpush.bf16.msra.mxu0 %v1019
    %1029 = vmatpush.bf16.msra.mxu0 %v1018
    %1030 = vmatpush.bf16.msra.mxu0 %v1017
    %1031 = vmatpush.bf16.msra.mxu0 %v1016
    %1032 = vmatpush.bf16.msra.mxu0 %v1015
    %1033 = vmatpush.bf16.msra.mxu0 %v1014
    %1034 = vmatpush.bf16.msra.mxu0 %v1013
    %1035 = vmatpush.bf16.msra.mxu0 %v1012
    %1036 = vmatmul.bf16.gmra.mxu0 %v959
    %v1037 = vpop.f32.mrf.mxu0
    %v1038 = vadd.f32 %v978, %v1037
    %v1039 = vpop.f32.mrf.mxu0
    %v1040 = vadd.f32 %v978, %v1039
    %1041 = vdwg.mxu0
    %v1042 = vmax.f32 %v1038, 0.0
    %v1043 = vmax.f32 %v1040, 0.0
    %v1044 = vmin.f32 %v1042, 1.0
    %v1045 = vmin.f32 %v1043, 1.0
    %1046 = vst [vmem:[#allocation11] sm:$0xff] %v1044
    %1047 = vst [vmem:[#allocation11 + $0x8] sm:$0xff] %v1045
    // Predicated region
    $region58: #{tpu_custom_call.1} parent=1 // pred_check
      _
    $region59: #{tpu_custom_call.1} parent=1 // pred_check_branch
      %1049 = sbr.rel (0) target = $region61
    $region60: #{tpu_custom_call.1} parent=1 // pred_region
      %1051 = vsyncadd [#allocation4], 0
      %s1052 = sshll.u32 [#allocation11], 4
      %s1053 = int_to_ptr.vmem [resolvable:$true] %s1052
      %s1054 = sshll.u32 %s9, 4
      %s1055 = int_to_ptr.hbm [resolvable:$true] %s1054
      %1060 = dma.vmem_to_hbm [thread:$0]  %s1053, 256, %s1055, [#allocation4], 128, 128, 8
    $region61: #{tpu_custom_call.1} parent=1 // pred_fallthru
      _
    // Predicated region
    $region62: #{tpu_custom_call.1} parent=1 // pred_check
      _
    $region63: #{tpu_custom_call.1} parent=1 // pred_check_branch
      %1062 = sbr.rel (0) target = $region65
    $region64: #{tpu_custom_call.1} parent=1 // pred_region
      %1064 = dma.done [#allocation4], 256
    $region65: #{tpu_custom_call.1} parent=1 // pred_fallthru
      _
    %1065 = vsyncpa [#allocation3], 1
    %1066 = vsyncpa [#allocation6], 1
    %1067 = vsyncpa [#allocation9], 1
    %1068 = vsyncpa [#allocation4], 1

</llo_original>
